<compile_context>
chip_gen: v7x
topology: tpu7x:2x2x1
jax: 0.10.0
libtpu: 0.0.40
codegen_flags: <defaults>
</compile_context>

<pallas_src>
import functools
import itertools

import jax
import jax.numpy as jnp
import numpy as np
from jax.experimental import pallas as pl
from jax.experimental.pallas import tpu as pltpu


def _round_up(x, m):
    return ((x + m - 1) // m) * m


def _cdiv(a, b):
    return -(-a // b)


# ----------------------------------------------------------------------------
# Pallas kernel
# ----------------------------------------------------------------------------
def _cost_kernel(logits_ref, onehot_ref, pfeat_ref, tfeat_ref, c_ref,
                 delta_ref, *, alpha, w_class, w_bbox, w_giou):
    f32 = jnp.float32

    # ---- focal classification delta on [N_tile, C_pad], computed once per
    #      N tile (T axis is the innermost "arbitrary" grid axis) ----------
    @pl.when(pl.program_id(1) == 0)
    def _():
        x = logits_ref[...].astype(f32)                    # [Nt, Cp]
        p = jax.nn.sigmoid(x)
        omp = 1.0 - p
        # -log(sigmoid(x)) = softplus(-x);  -log(1-sigmoid(x)) = x + softplus(-x)
        sp_neg_x = jnp.maximum(-x, 0.0) + jnp.log1p(jnp.exp(-jnp.abs(x)))
        sp_pos_x = x + sp_neg_x
        # gamma == 2.0 -> explicit squares (no pow)
        pos_cost = alpha * (omp * omp) * sp_neg_x
        neg_cost = (1.0 - alpha) * (p * p) * sp_pos_x
        # fold w_class here (small slab) so no full-tile multiply is needed
        delta_ref[...] = w_class * (pos_cost - neg_cost)

    # class-cost gather: one MXU matmul against the one-hot matrix
    cost_class = jnp.dot(delta_ref[...], onehot_ref[...].astype(f32),
                         preferred_element_type=f32)       # [Nt, Tt]

    # ---- precomputed box features: (cx, cy, w, h, x0, y0, x1, y1) ----
    pf = pfeat_ref[...].astype(f32)                        # [Nt, 8]
    tf = tfeat_ref[...].astype(f32)                        # [8, Tt]

    # ---- L1 cdist over cxcywh (seed with k=0 term; 2-D broadcasts only) ----
    cost_bbox = jnp.abs(pf[:, 0:1] - tf[0:1, :])
    for k in range(1, 4):
        cost_bbox = cost_bbox + jnp.abs(pf[:, k:k + 1] - tf[k:k + 1, :])

    # ---- generalized IoU ----
    px0, py0, px1, py1 = pf[:, 4:5], pf[:, 5:6], pf[:, 6:7], pf[:, 7:8]
    tx0, ty0, tx1, ty1 = tf[4:5, :], tf[5:6, :], tf[6:7, :], tf[7:8, :]
    area_p = pf[:, 2:3] * pf[:, 3:4]                       # [Nt, 1]
    area_t = tf[2:3, :] * tf[3:4, :]                       # [1, Tt]

    inter_w = jnp.maximum(jnp.minimum(px1, tx1) - jnp.maximum(px0, tx0), 0.0)
    inter_h = jnp.maximum(jnp.minimum(py1, ty1) - jnp.maximum(py0, ty0), 0.0)
    inter = inter_w * inter_h                              # [Nt, Tt]
    union = area_p + area_t - inter
    inv_union = pl.reciprocal(union, approx=True)          # EUP slot, ~free
    iou = inter * inv_union

    # max - min is always >= 0, no clamp needed
    enc_w = jnp.maximum(px1, tx1) - jnp.minimum(px0, tx0)
    enc_h = jnp.maximum(py1, ty1) - jnp.minimum(py0, ty0)
    enc_area = enc_w * enc_h
    inv_enc = pl.reciprocal(enc_area, approx=True)         # EUP slot, ~free
    giou = iou - (enc_area - union) * inv_enc

    # w_class already folded into cost_class; GIoU negation folded into weight
    c_ref[...] = (cost_class + w_bbox * cost_bbox - w_giou * giou
                  ).astype(c_ref.dtype)


# ----------------------------------------------------------------------------
# Wrapper
# ----------------------------------------------------------------------------
def _box_feats(boxes):
    """[M, 4] cxcywh -> [M, 8] (cx, cy, w, h, x0, y0, x1, y1) in f32."""
    b = boxes.astype(jnp.float32)
    cx, cy, w, h = b[:, 0], b[:, 1], b[:, 2], b[:, 3]
    return jnp.stack([cx, cy, w, h,
                      cx - 0.5 * w, cy - 0.5 * h,
                      cx + 0.5 * w, cy + 0.5 * h], axis=1)


def _plan_axis(padded_min, align, cap, min_blocks=1):
    """Balanced block plan: block multiple of `align`, <= cap, >= min_blocks."""
    n_blocks = max(_cdiv(padded_min, cap), min_blocks)
    block = min(_round_up(_cdiv(padded_min, n_blocks), align), cap)
    return block, block * n_blocks


def _vmem_estimate(block_n, block_t, c_pad):
    """Rough f32 VMEM footprint: double-buffered tiles + delta scratch."""
    tiles = (block_n * c_pad + c_pad * block_t + block_n * 8 + 8 * block_t
             + block_n * block_t)
    scratch = block_n * c_pad
    return 4 * (2 * tiles + scratch)


def compute_cost_matrix(pred_logits, pred_boxes, tgt_ids, tgt_boxes,
                        cost_class=1.0, cost_bbox=1.0, cost_giou=1.0):
    """Returns C of shape [bs, num_queries, total_targets] (float32)."""
    bs, nq, nc = pred_logits.shape
    n = bs * nq
    t = int(tgt_ids.shape[0])

    # ---- tile plan -----------------------------------------------------
    # Lane axes (T, C) pad to 128, sublane axis (N) to 8.  Caps of 1024 keep
    # the plan inside the 32 MiB scoped VMEM request with double buffering
    # (v7x physical VMEM is 64 MiB, so this is safe on every generation);
    # the estimator below shrinks the caps if C is unusually wide.
    n_pad_min = _round_up(max(n, 8), 8)
    t_pad_min = _round_up(max(t, 1), 128)
    c_pad = _round_up(nc, 128)
    # >= 2 blocks on the parallel N axis so both v7x TensorCores get work.
    min_blocks_n = 2 if n_pad_min >= 16 else 1

    cap_n, cap_t = 1024, 1024
    while True:
        block_n, n_pad = _plan_axis(n_pad_min, 8, cap_n, min_blocks_n)
        block_t, t_pad = _plan_axis(t_pad_min, 128, cap_t, 1)
        if _vmem_estimate(block_n, block_t, c_pad) <= 24 * 1024 * 1024:
            break
        if cap_t >= cap_n and cap_t > 128:
            cap_t //= 2
        elif cap_n > 8:
            cap_n //= 2
        else:
            break

    # ---- operand preparation ------------------------------------------
    logits = pred_logits.reshape(n, nc)
    logits = jnp.pad(logits, ((0, n_pad - n), (0, c_pad - nc)))

    # One-hot built already transposed ([C, T]); padded classes/targets are 0
    # so they contribute nothing to the gather matmul.
    onehot = jax.nn.one_hot(tgt_ids, nc, axis=0, dtype=jnp.float32)   # [nc, t]
    onehot = jnp.pad(onehot, ((0, c_pad - nc), (0, t_pad - t)))

    # Pad boxes with valid dummy boxes so IoU/GIoU never divides by zero on
    # padded rows/columns; padded outputs are sliced off below.
    dummy = jnp.array([[0.5, 0.5, 0.5, 0.5]], jnp.float32)
    pb = pred_boxes.reshape(n, 4).astype(jnp.float32)
    pb = jnp.concatenate([pb, jnp.tile(dummy, (n_pad - n, 1))], axis=0)
    tb = tgt_boxes.astype(jnp.float32)
    tb = jnp.concatenate([tb, jnp.tile(dummy, (t_pad - t, 1))], axis=0)
    pfeat = _box_feats(pb)                # [n_pad, 8]
    tfeat = _box_feats(tb).T              # [8, t_pad]

    kernel = functools.partial(
        _cost_kernel, alpha=0.25,
        w_class=float(cost_class), w_bbox=float(cost_bbox),
        w_giou=float(cost_giou))

    grid = (n_pad // block_n, t_pad // block_t)
    c = pl.pallas_call(
        kernel,
        out_shape=jax.ShapeDtypeStruct((n_pad, t_pad), jnp.float32),
        grid=grid,
        in_specs=[
            pl.BlockSpec((block_n, c_pad), lambda i, j: (i, 0)),
            pl.BlockSpec((c_pad, block_t), lambda i, j: (0, j)),
            pl.BlockSpec((block_n, 8), lambda i, j: (i, 0)),
            pl.BlockSpec((8, block_t), lambda i, j: (0, j)),
        ],
        out_specs=pl.BlockSpec((block_n, block_t), lambda i, j: (i, j)),
        scratch_shapes=[pltpu.VMEM((block_n, c_pad), jnp.float32)],
        compiler_params=pltpu.CompilerParams(
            # N is parallel (megacore sharding); T must stay sequential and
            # innermost so the cached focal delta is valid per N tile.
            dimension_semantics=("parallel", "arbitrary"),
            vmem_limit_bytes=32 * 1024 * 1024),
    )(logits, onehot, pfeat, tfeat)

    return c[:n, :t].reshape(bs, nq, t)


# ----------------------------------------------------------------------------
# Host-side exact linear sum assignment (scipy-equivalent, pure Python)
# ----------------------------------------------------------------------------
def _linear_sum_assignment(cost):
    """Exact min-cost assignment (shortest augmenting path, O(n^3)).

    Equivalent to scipy.optimize.linear_sum_assignment for a dense float cost
    matrix.  Returns (row_ind, col_ind), sorted by row index.
    """
    # TODO(synk): the Hungarian algorithm is a sequential combinatorial
    # procedure with no Pallas equivalent; solved exactly on host.
    cost = np.asarray(cost, dtype=np.float64)
    transposed = False
    if cost.shape[0] > cost.shape[1]:
        cost = cost.T
        transposed = True
    nr, ncol = cost.shape
    INF = float("inf")
    u = [0.0] * (nr + 1)
    v = [0.0] * (ncol + 1)
    p = [0] * (ncol + 1)          # p[j]: row (1-based) assigned to column j
    way = [0] * (ncol + 1)
    for i in range(1, nr + 1):
        p[0] = i
        j0 = 0
        minv = [INF] * (ncol + 1)
        used = [False] * (ncol + 1)
        while True:
            used[j0] = True
            i0 = p[j0]
            delta = INF
            j1 = 0
            for j in range(1, ncol + 1):
                if used[j]:
                    continue
                cur = cost[i0 - 1, j - 1] - u[i0] - v[j]
                if cur < minv[j]:
                    minv[j] = cur
                    way[j] = j0
                if minv[j] < delta:
                    delta = minv[j]
                    j1 = j
            for j in range(ncol + 1):
                if used[j]:
                    u[p[j]] += delta
                    v[j] -= delta
                else:
                    minv[j] -= delta
            j0 = j1
            if p[j0] == 0:
                break
        while True:
            j1 = way[j0]
            p[j0] = p[j1]
            j0 = j1
            if j0 == 0:
                break
    rows, cols = [], []
    for j in range(1, ncol + 1):
        if p[j] != 0:
            rows.append(p[j] - 1)
            cols.append(j - 1)
    rows = np.asarray(rows, dtype=np.int64)
    cols = np.asarray(cols, dtype=np.int64)
    if transposed:
        rows, cols = cols, rows
    order = np.argsort(rows)
    return rows[order], cols[order]


def hungarian_matcher(outputs, targets, cost_class=1.0, cost_bbox=1.0,
                      cost_giou=1.0):
    """JAX/Pallas equivalent of HungarianMatcher.forward."""
    tgt_ids = jnp.concatenate([v["labels"] for v in targets])
    tgt_boxes = jnp.concatenate([v["boxes"] for v in targets])
    C = compute_cost_matrix(outputs["pred_logits"], outputs["pred_boxes"],
                            tgt_ids, tgt_boxes,
                            cost_class=cost_class, cost_bbox=cost_bbox,
                            cost_giou=cost_giou)
    C = np.asarray(jax.block_until_ready(C))
    sizes = [int(v["boxes"].shape[0]) for v in targets]
    offsets = np.cumsum([0] + sizes)
    indices = []
    for b in range(len(targets)):
        c_b = C[b][:, offsets[b]:offsets[b + 1]]
        indices.append(_linear_sum_assignment(c_b))
    return C, indices


# ----------------------------------------------------------------------------
# Pure-numpy reference (matches the PyTorch module)
# ----------------------------------------------------------------------------
def _reference_cost_matrix(pred_logits, pred_boxes, tgt_ids, tgt_boxes):
    pl_ = np.asarray(pred_logits, dtype=np.float64)
    pb = np.asarray(pred_boxes, dtype=np.float64)
    ti = np.asarray(tgt_ids)
    tb = np.asarray(tgt_boxes, dtype=np.float64)
    bs, nq, nc = pl_.shape
    prob = 1.0 / (1.0 + np.exp(-pl_.reshape(-1, nc)))
    ob = pb.reshape(-1, 4)
    alpha, gamma = 0.25, 2.0
    neg = (1 - alpha) * prob ** gamma * -np.log(1 - prob + 1e-8)
    pos = alpha * (1 - prob) ** gamma * -np.log(prob + 1e-8)
    cost_class = pos[:, ti] - neg[:, ti]
    cost_bbox = np.abs(ob[:, None, :] - tb[None, :, :]).sum(-1)

    def to_xyxy(b):
        return np.stack([b[:, 0] - b[:, 2] / 2, b[:, 1] - b[:, 3] / 2,
                         b[:, 0] + b[:, 2] / 2, b[:, 1] + b[:, 3] / 2], -1)

    a, b_ = to_xyxy(ob), to_xyxy(tb)
    area_a = (a[:, 2] - a[:, 0]) * (a[:, 3] - a[:, 1])
    area_b = (b_[:, 2] - b_[:, 0]) * (b_[:, 3] - b_[:, 1])
    lt = np.maximum(a[:, None, :2], b_[None, :, :2])
    rb = np.minimum(a[:, None, 2:], b_[None, :, 2:])
    wh = np.clip(rb - lt, 0, None)
    inter = wh[..., 0] * wh[..., 1]
    union = area_a[:, None] + area_b[None, :] - inter
    iou = inter / union
    ltE = np.minimum(a[:, None, :2], b_[None, :, :2])
    rbE = np.maximum(a[:, None, 2:], b_[None, :, 2:])
    whE = np.clip(rbE - ltE, 0, None)
    areaE = whE[..., 0] * whE[..., 1]
    giou = iou - (areaE - union) / areaE
    C = cost_bbox + cost_class + (-giou)
    return C.reshape(bs, nq, -1)


if __name__ == "__main__":
    bs, nq, num_classes = 2, 8, 8
    sizes = [3, 3]  # targets per batch element
    key = jax.random.PRNGKey(0)
    k1, k2, k3, k4 = jax.random.split(key, 4)

    pred_logits = jax.random.normal(k1, (bs, nq, num_classes), jnp.float32)
    pred_boxes = jax.random.uniform(k2, (bs, nq, 4), jnp.float32,
                                    minval=0.1, maxval=0.5)
    total_t = sum(sizes)
    tgt_boxes_all = jax.random.uniform(k3, (total_t, 4), jnp.float32,
                                       minval=0.1, maxval=0.5)
    tgt_ids_all = jax.random.randint(k4, (total_t,), 0, num_classes, jnp.int32)

    targets, off = [], 0
    for s in sizes:
        targets.append({"labels": tgt_ids_all[off:off + s],
                        "boxes": tgt_boxes_all[off:off + s]})
        off += s
    outputs = {"pred_logits": pred_logits, "pred_boxes": pred_boxes}

    C, indices = hungarian_matcher(outputs, targets)

    # validate the Pallas cost matrix against a pure-numpy reference
    # (tolerance relaxed to 1e-3 because pl.reciprocal(approx=True) carries
    #  ~2^-12 relative error in IoU/GIoU)
    C_ref = _reference_cost_matrix(pred_logits, pred_boxes,
                                   tgt_ids_all, tgt_boxes_all)
    np.testing.assert_allclose(C, C_ref, rtol=2e-3, atol=2e-3)

    # validate the assignments: correct size, 1-to-1, and optimal (brute force
    # over permutations at these toy sizes)
    offsets = np.cumsum([0] + sizes)
    for b, ((ri, ci), s) in enumerate(zip(indices, sizes)):
        assert len(ri) == len(ci) == min(nq, s)
        assert len(set(ri.tolist())) == len(ri)
        assert len(set(ci.tolist())) == len(ci)
        c_b = C[b][:, offsets[b]:offsets[b + 1]]
        got = float(c_b[ri, ci].sum())
        best = min(sum(c_b[perm[j], j] for j in range(s))
                   for perm in itertools.permutations(range(nq), s))
        assert got <= best + 1e-5

    print("KERNEL_OK")
</pallas_src>

<mosaic_0001>
module attributes {stable_mosaic.version = 11 : i64} {
  func.func @_cost_kernel(%arg0: i32, %arg1: i32, %arg2: memref<8x128xf32, #tpu.memory_space<vmem>>, %arg3: memref<128x128xf32, #tpu.memory_space<vmem>>, %arg4: memref<8x8xf32, #tpu.memory_space<vmem>>, %arg5: memref<8x128xf32, #tpu.memory_space<vmem>>, %arg6: memref<8x128xf32, #tpu.memory_space<vmem>>, %arg7: memref<8x128xf32, #tpu.memory_space<vmem>>) attributes {dimension_semantics = [#tpu.dimension_semantics<parallel>, #tpu.dimension_semantics<arbitrary>], iteration_bounds = array<i64: 2, 1>, scalar_prefetch = 0 : i64, scratch_operands = 1 : i64, tpu.core_type = #tpu.core_type<tc>, window_params = [{transform_indices = @transform_0, window_bounds = array<i64: 8, 128>}, {transform_indices = @transform_1, window_bounds = array<i64: 128, 128>}, {transform_indices = @transform_2, window_bounds = array<i64: 8, 8>}, {transform_indices = @transform_3, window_bounds = array<i64: 8, 128>}, {transform_indices = @transform_4, window_bounds = array<i64: 8, 128>}]} {
    %c0_i32 = arith.constant 0 : i32
    %0 = arith.cmpi eq, %arg1, %c0_i32 : i32
    %1 = arith.extui %0 : i1 to i32
    %c0_i32_0 = arith.constant 0 : i32
    %2 = arith.cmpi ne, %1, %c0_i32_0 : i32
    scf.if %2 {
      %c0_14 = arith.constant 0 : index
      %c0_15 = arith.constant 0 : index
      %100 = vector.load %arg2[%c0_14, %c0_15] : memref<8x128xf32, #tpu.memory_space<vmem>>, vector<8x128xf32>
      %101 = arith.negf %100 : vector<8x128xf32>
      %102 = math.exp %101 : vector<8x128xf32>
      %cst_16 = arith.constant 1.000000e+00 : f32
      %103 = vector.broadcast %cst_16 : f32 to vector<8x128xf32>
      %104 = arith.addf %103, %102 : vector<8x128xf32>
      %105 = arith.divf %103, %104 : vector<8x128xf32>
      %cst_17 = arith.constant 1.000000e+00 : f32
      %106 = vector.broadcast %cst_17 : f32 to vector<8x128xf32>
      %107 = arith.subf %106, %105 : vector<8x128xf32>
      %cst_18 = arith.constant 0.000000e+00 : f32
      %108 = vector.broadcast %cst_18 : f32 to vector<8x128xf32>
      %109 = arith.subf %108, %100 : vector<8x128xf32>
      %cst_19 = arith.constant 0.000000e+00 : f32
      %110 = vector.broadcast %cst_19 : f32 to vector<8x128xf32>
      %111 = arith.maximumf %109, %110 : vector<8x128xf32>
      %112 = math.absf %100 : vector<8x128xf32>
      %cst_20 = arith.constant 0.000000e+00 : f32
      %113 = vector.broadcast %cst_20 : f32 to vector<8x128xf32>
      %114 = arith.subf %113, %112 : vector<8x128xf32>
      %115 = math.exp %114 : vector<8x128xf32>
      %116 = math.log1p %115 : vector<8x128xf32>
      %117 = arith.addf %111, %116 : vector<8x128xf32>
      %118 = arith.addf %100, %117 : vector<8x128xf32>
      %119 = arith.mulf %107, %107 : vector<8x128xf32>
      %cst_21 = arith.constant 2.500000e-01 : f32
      %120 = vector.broadcast %cst_21 : f32 to vector<8x128xf32>
      %121 = arith.mulf %120, %119 : vector<8x128xf32>
      %122 = arith.mulf %121, %117 : vector<8x128xf32>
      %123 = arith.mulf %105, %105 : vector<8x128xf32>
      %cst_22 = arith.constant 7.500000e-01 : f32
      %124 = vector.broadcast %cst_22 : f32 to vector<8x128xf32>
      %125 = arith.mulf %124, %123 : vector<8x128xf32>
      %126 = arith.mulf %125, %118 : vector<8x128xf32>
      %127 = arith.subf %122, %126 : vector<8x128xf32>
      %cst_23 = arith.constant 1.000000e+00 : f32
      %128 = vector.broadcast %cst_23 : f32 to vector<8x128xf32>
      %129 = arith.mulf %128, %127 : vector<8x128xf32>
      %c0_24 = arith.constant 0 : index
      %c0_25 = arith.constant 0 : index
      %130 = vector.load %arg7[%c0_24, %c0_25] : memref<8x128xf32, #tpu.memory_space<vmem>>, vector<8x128xf32>
      tpu.vector_store %arg7[%c0_24, %c0_25], %129 {strides = array<i32>} : memref<8x128xf32, #tpu.memory_space<vmem>>, vector<8x128xf32>,
    } else {
    }
    %c0 = arith.constant 0 : index
    %c0_1 = arith.constant 0 : index
    %3 = vector.load %arg7[%c0, %c0_1] : memref<8x128xf32, #tpu.memory_space<vmem>>, vector<8x128xf32>
    %c0_2 = arith.constant 0 : index
    %c0_3 = arith.constant 0 : index
    %4 = vector.load %arg3[%c0_2, %c0_3] : memref<128x128xf32, #tpu.memory_space<vmem>>, vector<128x128xf32>
    %cst = arith.constant dense<0.000000e+00> : vector<8x128xf32>
    %5 = tpu.matmul %3, %4, %cst {dimension_numbers = #tpu.dot_dimension_numbers<[1], [0], [0], [1], [0, 0, 1, 1], [], []>} : vector<8x128xf32>, vector<128x128xf32>, vector<8x128xf32> -> vector<8x128xf32>
    %c0_4 = arith.constant 0 : index
    %c0_5 = arith.constant 0 : index
    %6 = vector.load %arg4[%c0_4, %c0_5] : memref<8x8xf32, #tpu.memory_space<vmem>>, vector<8x8xf32>
    %c0_6 = arith.constant 0 : index
    %c0_7 = arith.constant 0 : index
    %7 = vector.load %arg5[%c0_6, %c0_7] : memref<8x128xf32, #tpu.memory_space<vmem>>, vector<8x128xf32>
    %8 = vector.extract_strided_slice %6 {offsets = [0, 0], sizes = [8, 1], strides = [1, 1]} : vector<8x8xf32> to vector<8x1xf32>
    %9 = vector.extract_strided_slice %7 {offsets = [0, 0], sizes = [1, 128], strides = [1, 1]} : vector<8x128xf32> to vector<1x128xf32>
    %10 = vector.broadcast %8 : vector<8x1xf32> to vector<8x128xf32>
    %11 = vector.broadcast %9 : vector<1x128xf32> to vector<8x128xf32>
    %12 = arith.subf %10, %11 : vector<8x128xf32>
    %13 = math.absf %12 : vector<8x128xf32>
    %14 = vector.extract_strided_slice %6 {offsets = [0, 1], sizes = [8, 1], strides = [1, 1]} : vector<8x8xf32> to vector<8x1xf32>
    %15 = vector.extract_strided_slice %7 {offsets = [1, 0], sizes = [1, 128], strides = [1, 1]} : vector<8x128xf32> to vector<1x128xf32>
    %16 = vector.broadcast %14 : vector<8x1xf32> to vector<8x128xf32>
    %17 = vector.broadcast %15 : vector<1x128xf32> to vector<8x128xf32>
    %18 = arith.subf %16, %17 : vector<8x128xf32>
    %19 = math.absf %18 : vector<8x128xf32>
    %20 = arith.addf %13, %19 : vector<8x128xf32>
    %21 = vector.extract_strided_slice %6 {offsets = [0, 2], sizes = [8, 1], strides = [1, 1]} : vector<8x8xf32> to vector<8x1xf32>
    %22 = vector.extract_strided_slice %7 {offsets = [2, 0], sizes = [1, 128], strides = [1, 1]} : vector<8x128xf32> to vector<1x128xf32>
    %23 = vector.broadcast %21 : vector<8x1xf32> to vector<8x128xf32>
    %24 = vector.broadcast %22 : vector<1x128xf32> to vector<8x128xf32>
    %25 = arith.subf %23, %24 : vector<8x128xf32>
    %26 = math.absf %25 : vector<8x128xf32>
    %27 = arith.addf %20, %26 : vector<8x128xf32>
    %28 = vector.extract_strided_slice %6 {offsets = [0, 3], sizes = [8, 1], strides = [1, 1]} : vector<8x8xf32> to vector<8x1xf32>
    %29 = vector.extract_strided_slice %7 {offsets = [3, 0], sizes = [1, 128], strides = [1, 1]} : vector<8x128xf32> to vector<1x128xf32>
    %30 = vector.broadcast %28 : vector<8x1xf32> to vector<8x128xf32>
    %31 = vector.broadcast %29 : vector<1x128xf32> to vector<8x128xf32>
    %32 = arith.subf %30, %31 : vector<8x128xf32>
    %33 = math.absf %32 : vector<8x128xf32>
    %34 = arith.addf %27, %33 : vector<8x128xf32>
    %35 = vector.extract_strided_slice %6 {offsets = [0, 4], sizes = [8, 1], strides = [1, 1]} : vector<8x8xf32> to vector<8x1xf32>
    %36 = vector.extract_strided_slice %6 {offsets = [0, 5], sizes = [8, 1], strides = [1, 1]} : vector<8x8xf32> to vector<8x1xf32>
    %37 = vector.extract_strided_slice %6 {offsets = [0, 6], sizes = [8, 1], strides = [1, 1]} : vector<8x8xf32> to vector<8x1xf32>
    %38 = vector.extract_strided_slice %6 {offsets = [0, 7], sizes = [8, 1], strides = [1, 1]} : vector<8x8xf32> to vector<8x1xf32>
    %39 = vector.extract_strided_slice %7 {offsets = [4, 0], sizes = [1, 128], strides = [1, 1]} : vector<8x128xf32> to vector<1x128xf32>
    %40 = vector.extract_strided_slice %7 {offsets = [5, 0], sizes = [1, 128], strides = [1, 1]} : vector<8x128xf32> to vector<1x128xf32>
    %41 = vector.extract_strided_slice %7 {offsets = [6, 0], sizes = [1, 128], strides = [1, 1]} : vector<8x128xf32> to vector<1x128xf32>
    %42 = vector.extract_strided_slice %7 {offsets = [7, 0], sizes = [1, 128], strides = [1, 1]} : vector<8x128xf32> to vector<1x128xf32>
    %43 = vector.extract_strided_slice %6 {offsets = [0, 2], sizes = [8, 1], strides = [1, 1]} : vector<8x8xf32> to vector<8x1xf32>
    %44 = vector.extract_strided_slice %6 {offsets = [0, 3], sizes = [8, 1], strides = [1, 1]} : vector<8x8xf32> to vector<8x1xf32>
    %45 = arith.mulf %43, %44 : vector<8x1xf32>
    %46 = vector.extract_strided_slice %7 {offsets = [2, 0], sizes = [1, 128], strides = [1, 1]} : vector<8x128xf32> to vector<1x128xf32>
    %47 = vector.extract_strided_slice %7 {offsets = [3, 0], sizes = [1, 128], strides = [1, 1]} : vector<8x128xf32> to vector<1x128xf32>
    %48 = arith.mulf %46, %47 : vector<1x128xf32>
    %49 = vector.broadcast %37 : vector<8x1xf32> to vector<8x128xf32>
    %50 = vector.broadcast %41 : vector<1x128xf32> to vector<8x128xf32>
    %51 = arith.minimumf %49, %50 : vector<8x128xf32>
    %52 = vector.broadcast %35 : vector<8x1xf32> to vector<8x128xf32>
    %53 = vector.broadcast %39 : vector<1x128xf32> to vector<8x128xf32>
    %54 = arith.maximumf %52, %53 : vector<8x128xf32>
    %55 = arith.subf %51, %54 : vector<8x128xf32>
    %cst_8 = arith.constant 0.000000e+00 : f32
    %56 = vector.broadcast %cst_8 : f32 to vector<8x128xf32>
    %57 = arith.maximumf %55, %56 : vector<8x128xf32>
    %58 = vector.broadcast %38 : vector<8x1xf32> to vector<8x128xf32>
    %59 = vector.broadcast %42 : vector<1x128xf32> to vector<8x128xf32>
    %60 = arith.minimumf %58, %59 : vector<8x128xf32>
    %61 = vector.broadcast %36 : vector<8x1xf32> to vector<8x128xf32>
    %62 = vector.broadcast %40 : vector<1x128xf32> to vector<8x128xf32>
    %63 = arith.maximumf %61, %62 : vector<8x128xf32>
    %64 = arith.subf %60, %63 : vector<8x128xf32>
    %cst_9 = arith.constant 0.000000e+00 : f32
    %65 = vector.broadcast %cst_9 : f32 to vector<8x128xf32>
    %66 = arith.maximumf %64, %65 : vector<8x128xf32>
    %67 = arith.mulf %57, %66 : vector<8x128xf32>
    %68 = vector.broadcast %45 : vector<8x1xf32> to vector<8x128xf32>
    %69 = vector.broadcast %48 : vector<1x128xf32> to vector<8x128xf32>
    %70 = arith.addf %68, %69 : vector<8x128xf32>
    %71 = arith.subf %70, %67 : vector<8x128xf32>
    %72 = tpu.reciprocal %71 {approx = true} : vector<8x128xf32> -> vector<8x128xf32>
    %73 = arith.mulf %67, %72 : vector<8x128xf32>
    %74 = vector.broadcast %37 : vector<8x1xf32> to vector<8x128xf32>
    %75 = vector.broadcast %41 : vector<1x128xf32> to vector<8x128xf32>
    %76 = arith.maximumf %74, %75 : vector<8x128xf32>
    %77 = vector.broadcast %35 : vector<8x1xf32> to vector<8x128xf32>
    %78 = vector.broadcast %39 : vector<1x128xf32> to vector<8x128xf32>
    %79 = arith.minimumf %77, %78 : vector<8x128xf32>
    %80 = arith.subf %76, %79 : vector<8x128xf32>
    %81 = vector.broadcast %38 : vector<8x1xf32> to vector<8x128xf32>
    %82 = vector.broadcast %42 : vector<1x128xf32> to vector<8x128xf32>
    %83 = arith.maximumf %81, %82 : vector<8x128xf32>
    %84 = vector.broadcast %36 : vector<8x1xf32> to vector<8x128xf32>
    %85 = vector.broadcast %40 : vector<1x128xf32> to vector<8x128xf32>
    %86 = arith.minimumf %84, %85 : vector<8x128xf32>
    %87 = arith.subf %83, %86 : vector<8x128xf32>
    %88 = arith.mulf %80, %87 : vector<8x128xf32>
    %89 = tpu.reciprocal %88 {approx = true} : vector<8x128xf32> -> vector<8x128xf32>
    %90 = arith.subf %88, %71 : vector<8x128xf32>
    %91 = arith.mulf %90, %89 : vector<8x128xf32>
    %92 = arith.subf %73, %91 : vector<8x128xf32>
    %cst_10 = arith.constant 1.000000e+00 : f32
    %93 = vector.broadcast %cst_10 : f32 to vector<8x128xf32>
    %94 = arith.mulf %93, %34 : vector<8x128xf32>
    %95 = arith.addf %5, %94 : vector<8x128xf32>
    %cst_11 = arith.constant 1.000000e+00 : f32
    %96 = vector.broadcast %cst_11 : f32 to vector<8x128xf32>
    %97 = arith.mulf %96, %92 : vector<8x128xf32>
    %98 = arith.subf %95, %97 : vector<8x128xf32>
    %c0_12 = arith.constant 0 : index
    %c0_13 = arith.constant 0 : index
    %99 = vector.load %arg6[%c0_12, %c0_13] : memref<8x128xf32, #tpu.memory_space<vmem>>, vector<8x128xf32>
    tpu.vector_store %arg6[%c0_12, %c0_13], %98 {strides = array<i32>} : memref<8x128xf32, #tpu.memory_space<vmem>>, vector<8x128xf32>,
    return
  }
  func.func @transform_0(%arg0: i32, %arg1: i32) -> (i32, i32) {
    %c0_i32 = arith.constant 0 : i32
    %c0_i32_0 = arith.constant 0 : i32
    return %arg0, %c0_i32 : i32, i32
  }
  func.func @transform_1(%arg0: i32, %arg1: i32) -> (i32, i32) {
    %c0_i32 = arith.constant 0 : i32
    %c0_i32_0 = arith.constant 0 : i32
    return %c0_i32, %arg1 : i32, i32
  }
  func.func @transform_2(%arg0: i32, %arg1: i32) -> (i32, i32) {
    %c0_i32 = arith.constant 0 : i32
    %c0_i32_0 = arith.constant 0 : i32
    return %arg0, %c0_i32 : i32, i32
  }
  func.func @transform_3(%arg0: i32, %arg1: i32) -> (i32, i32) {
    %c0_i32 = arith.constant 0 : i32
    %c0_i32_0 = arith.constant 0 : i32
    return %c0_i32, %arg1 : i32, i32
  }
  func.func @transform_4(%arg0: i32, %arg1: i32) -> (i32, i32) {
    %c0_i32 = arith.constant 0 : i32
    return %arg0, %arg1 : i32, i32
  }
}

</mosaic_0001>

<llo_original>
// kernel: tpu_custom_call.1
$region0: #{tpu_custom_call.1}
  #allocation0 [shape = 'u32[]', space=smem, size = 0x4, offset = 0x4, fixed_abs, tag = 'smem constant byte address 0x4 - core index']
  #allocation1 [shape = 'u32[144,128]{1,0:T(1,128)}', space=vmem, size = 0x12000, scoped, tag = 'internal scratch']
  #allocation2 [shape = 'f32[8,128]{1,0:T(8,128)}', space=vmem, size = 0x1000, scoped, tag = 'scratch operand']
  %s0 = inlined_call_operand.vmem [shape: f32[16,128], index: 0, kind: input, shape index: {}]
  %s1 = inlined_call_operand.hbm [shape: f32[128,128], index: 1, kind: input, shape index: {}]
  %s2 = inlined_call_operand.vmem [shape: f32[16,8], index: 2, kind: input, shape index: {}]
  %s3 = inlined_call_operand.vmem [shape: f32[8,128], index: 3, kind: input, shape index: {}]
  %s4 = inlined_call_operand.hbm [shape: f32[16,128], index: 4, kind: output, shape index: {}]
  %s5 = sld [smem:[#allocation0]]
  $region57: #{tpu_custom_call.1} parent=0
    _
  %s7 = ssub.s32 1, %s5
  %s8 = scalar_select 0, %s7, %s5
  $region1: #{tpu_custom_call.1} parent=0
    #allocation3 [shape = 'u8[65536]{0}', space=vmem, size = 0x10000, scoped, tag = 'input window, operand 1, single buffered']
    #allocation4 [shape = 's32[2]{0}', space=sflag, size = 0x8, scoped, tag = 'scoped memory for tpu_custom_call.1']
    #allocation5 [shape = 's32[2]{0}', space=sflag, size = 0x8, scoped, tag = 'scoped memory for tpu_custom_call.1']
    #allocation6 [shape = 'u8[8192]{0}', space=vmem, size = 0x2000, scoped, tag = 'output window, operand 0']
    %9 = vsyncpa [#allocation4], 0
    %10 = vsyncpa [#allocation5], 0
    %s11 = scalar_lea.sflag [#allocation5], 1
    %12 = vsyncpa %s11, 0
    loop: start=0, step=1, limit=4
    $region2: #{tpu_custom_call.1} parent=1 // loop_pre_header
      _
    $region3: #{tpu_custom_call.1} parent=1 // loop_header
      %s14 = sphi 0, %s18
      %p15 = scmp.ge.s32.totalorder %s14, 4
      %s21 = sphi 0, %s33
      %s22 = sphi 0, %s29
      %s23 = sphi 0, %s21
      %s24 = sphi 0, %s22
      %s25 = sphi 0, %s23
      %s26 = sphi 0, %s24
      %s36 = sphi 0, %s38
      %s39 = sphi 0, %s36
      %s40 = sphi 0, %s39
      %s56 = sphi 0, %s40
      %s62 = sphi 0, %s64
      %s65 = sphi 0, %s62
      %s66 = sphi 0, %s65
      %s82 = sphi 0, %s66
      %s88 = sphi 0, %s90
      %s91 = sphi 0, %s88
      %s92 = sphi 0, %s91
      %s108 = sphi 0, %s92
      %s114 = sphi 0, %s116
      %s117 = sphi 0, %s114
      %s118 = sphi 0, %s117
      %s134 = sphi 0, %s118
      %s142 = sphi 0, %s144
      %s145 = sphi 0, %s142
      %s146 = sphi 0, %s145
      %s162 = sphi 0, %s146
    $region4: #{tpu_custom_call.1} parent=1 // loop_header_branch
      %17 = sbr.rel (%p15) target = $region8
    $region5: #{tpu_custom_call.1} parent=1 // loop_body
      %s19 = ssub.s32 %s14, 1
      %s20 = ssub.s32 %s14, 2
      %s27 = sadd.s32 1, %s22
      %p28 = scmp.ge.s32.totalorder %s27, 1
      %s29 = scalar_select %p28, 0, %s27
      %s30 = sadd.s32 1, %s21
      %s31 = scalar_select %p28, %s30, %s21
      %p32 = scmp.ge.s32.totalorder %s31, 2
      %s33 = scalar_select %p32, 0, %s31
      %s34 = ssub.s32 %s21, %s33
      %p35 = scmp.eq.s32.totalorder %s34, 0
      %s37 = sadd.s32 %s36, 1
      %s38 = scalar_select %p35, %s36, %s37
      %p41 = pneg %p35
      %p42 = scmp.eq.s32.totalorder %s14, 1
      %p43 = por %p41, %p42
      %p44 = scmp.ne.s32.totalorder %s36, %s39
      %p45 = scmp.eq.s32.totalorder %s14, 0
      %p46 = por %p44, %p45
      %p47 = scmp.ne.s32.totalorder %s36, %s39
      %p48 = scmp.eq.s32.totalorder %s19, 1
      %p49 = por %p47, %p48
      %p50 = scmp.ne.s32.totalorder %s39, %s40
      %p51 = scmp.eq.s32.totalorder %s19, 0
      %p52 = por %p50, %p51
      %p53 = scmp.ne.s32.totalorder %s39, %s40
      %p54 = scmp.eq.s32.totalorder %s20, 1
      %p55 = por %p53, %p54
      %p57 = scmp.ne.s32.totalorder %s40, %s56
      %p58 = scmp.eq.s32.totalorder %s20, 0
      %p59 = por %p57, %p58
      %s60 = ssub.s32 %s22, %s29
      %p61 = scmp.eq.s32.totalorder %s60, 0
      %s63 = sadd.s32 %s62, 1
      %s64 = scalar_select %p61, %s62, %s63
      %p67 = pneg %p61
      %p68 = scmp.eq.s32.totalorder %s14, 1
      %p69 = por %p67, %p68
      %p70 = scmp.ne.s32.totalorder %s62, %s65
      %p71 = scmp.eq.s32.totalorder %s14, 0
      %p72 = por %p70, %p71
      %p73 = scmp.ne.s32.totalorder %s62, %s65
      %p74 = scmp.eq.s32.totalorder %s19, 1
      %p75 = por %p73, %p74
      %p76 = scmp.ne.s32.totalorder %s65, %s66
      %p77 = scmp.eq.s32.totalorder %s19, 0
      %p78 = por %p76, %p77
      %p79 = scmp.ne.s32.totalorder %s65, %s66
      %p80 = scmp.eq.s32.totalorder %s20, 1
      %p81 = por %p79, %p80
      %p83 = scmp.ne.s32.totalorder %s66, %s82
      %p84 = scmp.eq.s32.totalorder %s20, 0
      %p85 = por %p83, %p84
      %s86 = ssub.s32 %s21, %s33
      %p87 = scmp.eq.s32.totalorder %s86, 0
      %s89 = sadd.s32 %s88, 1
      %s90 = scalar_select %p87, %s88, %s89
      %p93 = pneg %p87
      %p94 = scmp.eq.s32.totalorder %s14, 1
      %p95 = por %p93, %p94
      %p96 = scmp.ne.s32.totalorder %s88, %s91
      %p97 = scmp.eq.s32.totalorder %s14, 0
      %p98 = por %p96, %p97
      %p99 = scmp.ne.s32.totalorder %s88, %s91
      %p100 = scmp.eq.s32.totalorder %s19, 1
      %p101 = por %p99, %p100
      %p102 = scmp.ne.s32.totalorder %s91, %s92
      %p103 = scmp.eq.s32.totalorder %s19, 0
      %p104 = por %p102, %p103
      %p105 = scmp.ne.s32.totalorder %s91, %s92
      %p106 = scmp.eq.s32.totalorder %s20, 1
      %p107 = por %p105, %p106
      %p109 = scmp.ne.s32.totalorder %s92, %s108
      %p110 = scmp.eq.s32.totalorder %s20, 0
      %p111 = por %p109, %p110
      %s112 = ssub.s32 %s22, %s29
      %p113 = scmp.eq.s32.totalorder %s112, 0
      %s115 = sadd.s32 %s114, 1
      %s116 = scalar_select %p113, %s114, %s115
      %p119 = pneg %p113
      %p120 = scmp.eq.s32.totalorder %s14, 1
      %p121 = por %p119, %p120
      %p122 = scmp.ne.s32.totalorder %s114, %s117
      %p123 = scmp.eq.s32.totalorder %s14, 0
      %p124 = por %p122, %p123
      %p125 = scmp.ne.s32.totalorder %s114, %s117
      %p126 = scmp.eq.s32.totalorder %s19, 1
      %p127 = por %p125, %p126
      %p128 = scmp.ne.s32.totalorder %s117, %s118
      %p129 = scmp.eq.s32.totalorder %s19, 0
      %p130 = por %p128, %p129
      %p131 = scmp.ne.s32.totalorder %s117, %s118
      %p132 = scmp.eq.s32.totalorder %s20, 1
      %p133 = por %p131, %p132
      %p135 = scmp.ne.s32.totalorder %s118, %s134
      %p136 = scmp.eq.s32.totalorder %s20, 0
      %p137 = por %p135, %p136
      %s138 = ssub.s32 %s21, %s33
      %s139 = ssub.s32 %s22, %s29
      %s140 = sor.u32 %s138, %s139
      %p141 = scmp.eq.s32.totalorder %s140, 0
      %s143 = sadd.s32 %s142, 1
      %s144 = scalar_select %p141, %s142, %s143
      %p147 = pneg %p141
      %p148 = scmp.eq.s32.totalorder %s14, 1
      %p149 = por %p147, %p148
      %p150 = scmp.ne.s32.totalorder %s142, %s145
      %p151 = scmp.eq.s32.totalorder %s14, 0
      %p152 = por %p150, %p151
      %p153 = scmp.ne.s32.totalorder %s142, %s145
      %p154 = scmp.eq.s32.totalorder %s19, 1
      %p155 = por %p153, %p154
      %p156 = scmp.ne.s32.totalorder %s145, %s146
      %p157 = scmp.eq.s32.totalorder %s19, 0
      %p158 = por %p156, %p157
      %p159 = scmp.ne.s32.totalorder %s145, %s146
      %p160 = scmp.eq.s32.totalorder %s20, 1
      %p161 = por %p159, %p160
      %p163 = scmp.ne.s32.totalorder %s146, %s162
      %p164 = scmp.eq.s32.totalorder %s20, 0
      %p165 = por %p163, %p164
      %p166 = scmp.le.s32.totalorder 1, %s14
      %p167 = scmp.lt.s32.totalorder %s14, 3
      %p168 = pnand %p166, %p167
      %p169 = pneg %p168
      // Predicated region
      $region9: #{tpu_custom_call.1} parent=5 // pred_check
        _
      $region10: #{tpu_custom_call.1} parent=5 // pred_check_branch
        %171 = sbr.rel (%p168) target = $region12
      $region11: #{tpu_custom_call.1} parent=5 // pred_region
        %s172 = ssub.s32 %s14, 1
        // Predicated region
        $region13: #{tpu_custom_call.1} parent=11 // pred_check
          %p173 = pneg %p78
        $region14: #{tpu_custom_call.1} parent=11 // pred_check_branch
          %175 = sbr.rel (%p173) target = $region16
        $region15: #{tpu_custom_call.1} parent=11 // pred_region
          %s177 = ssub.s32 2048, 2048
          %178 = vsyncadd [#allocation4], %s177
          %s179 = smul.addr %s24, 128
          %s180 = scalar_lea.hbm %s1, %s179
          %s181 = sshll.u32 [#allocation3], 4
          %s182 = int_to_ptr.vmem [resolvable:$true] %s181
          %187 = dma.hbm_to_vmem [thread:$0]  %s180, 2048, %s182, [#allocation4], 128, 128, 8
        $region16: #{tpu_custom_call.1} parent=11 // pred_fallthru
          _
        // Predicated region
        $region17: #{tpu_custom_call.1} parent=11 // pred_check
          %p188 = pneg %p130
        $region18: #{tpu_custom_call.1} parent=11 // pred_check_branch
          %190 = sbr.rel (%p188) target = $region20
        $region19: #{tpu_custom_call.1} parent=11 // pred_region
          %p191 = scmp.lt.s32.totalorder %s24, 0
          %s192 = scalar_select %p191, %s24, 0
          %s193 = smul.addr %s192, 8
          %s194 = scalar_lea.vmem %s3, %s193
        $region20: #{tpu_custom_call.1} parent=11 // pred_fallthru
          _
      $region12: #{tpu_custom_call.1} parent=5 // pred_fallthru
        _
      %p195 = scmp.lt.s32.totalorder %s14, 2
      // Predicated region
      $region21: #{tpu_custom_call.1} parent=5 // pred_check
        %p196 = pneg %p195
      $region22: #{tpu_custom_call.1} parent=5 // pred_check_branch
        %198 = sbr.rel (%p196) target = $region24
      $region23: #{tpu_custom_call.1} parent=5 // pred_region
        // Predicated region
        $region25: #{tpu_custom_call.1} parent=23 // pred_check
          %p199 = pneg %p46
        $region26: #{tpu_custom_call.1} parent=23 // pred_check_branch
          %201 = sbr.rel (%p199) target = $region28
        $region27: #{tpu_custom_call.1} parent=23 // pred_region
          %p202 = scmp.lt.s32.totalorder %s21, 1
          %s203 = scalar_select %p202, %s21, 1
          %s204 = smul.addr %s203, 8
          %s205 = scalar_lea.vmem %s0, %s204
        $region28: #{tpu_custom_call.1} parent=23 // pred_fallthru
          _
        // Predicated region
        $region29: #{tpu_custom_call.1} parent=23 // pred_check
          %p206 = pneg %p98
        $region30: #{tpu_custom_call.1} parent=23 // pred_check_branch
          %208 = sbr.rel (%p206) target = $region32
        $region31: #{tpu_custom_call.1} parent=23 // pred_region
          %p209 = scmp.lt.s32.totalorder %s21, 1
          %s210 = scalar_select %p209, %s21, 1
          %s211 = smul.addr %s210, 8
          %s212 = scalar_lea.vmem %s2, %s211
        $region32: #{tpu_custom_call.1} parent=23 // pred_fallthru
          _
      $region24: #{tpu_custom_call.1} parent=5 // pred_fallthru
        _
      %p213 = scmp.le.s32.totalorder 1, %s14
      %p214 = scmp.lt.s32.totalorder %s14, 3
      %p215 = pnand %p213, %p214
      %p216 = pneg %p215
      // Predicated region
      $region33: #{tpu_custom_call.1} parent=5 // pred_check
        _
      $region34: #{tpu_custom_call.1} parent=5 // pred_check_branch
        %218 = sbr.rel (%p215) target = $region36
      $region35: #{tpu_custom_call.1} parent=5 // pred_region
        %s219 = ssub.s32 %s14, 1
        // Predicated region
        $region37: #{tpu_custom_call.1} parent=35 // pred_check
          %p220 = pneg %p78
        $region38: #{tpu_custom_call.1} parent=35 // pred_check_branch
          %222 = sbr.rel (%p220) target = $region40
        $region39: #{tpu_custom_call.1} parent=35 // pred_region
          %223 = dma.done [#allocation4], 2048
        $region40: #{tpu_custom_call.1} parent=35 // pred_fallthru
          _
        %p224 = scmp.lt.s32.totalorder %s23, 1
        %s225 = scalar_select %p224, %s23, 1
        %s226 = smul.addr %s225, 8
        %s227 = scalar_lea.vmem %s0, %s226
        %p228 = pneg %p52
        %p229 = pneg %p49
        %p230 = pneg %p78
        %p231 = pneg %p75
        %p232 = scmp.lt.s32.totalorder %s23, 1
        %s233 = scalar_select %p232, %s23, 1
        %s234 = smul.addr %s233, 8
        %s235 = scalar_lea.vmem %s2, %s234
        %p236 = pneg %p104
        %p237 = pneg %p101
        %p238 = scmp.lt.s32.totalorder %s24, 0
        %s239 = scalar_select %p238, %s24, 0
        %s240 = smul.addr %s239, 8
        %s241 = scalar_lea.vmem %s3, %s240
        %p242 = pneg %p130
        %p243 = pneg %p127
        %p244 = pneg %p158
        %p245 = pneg %p155
        %s246 = sand.u32 %s145, 1
        %s247 = scalar_lea.sflag [#allocation5], %s246
        %s248 = sand.u32 %s145, 1
        %s249 = smul.addr %s248, 8
        %s250 = scalar_lea.vmem [#allocation6], %s249
        %p251 = scmp.lt.s32.totalorder %s23, 1
        %s252 = scalar_select %p251, %s23, 1
        %s253 = smul.addr %s252, 8
        %s254 = scalar_lea.vmem %s0, %s253
        %p255 = scmp.lt.s32.totalorder %s23, 1
        %s256 = scalar_select %p255, %s23, 1
        %s257 = smul.addr %s256, 8
        %s258 = scalar_lea.vmem %s2, %s257
        %p259 = scmp.lt.s32.totalorder %s24, 0
        %s260 = scalar_select %p259, %s24, 0
        %s261 = smul.addr %s260, 8
        %s262 = scalar_lea.vmem %s3, %s261
        %p263 = scmp.eq.s32.totalorder %s24, 0
        // Predicated region
        $region41: #{tpu_custom_call.1} parent=35 // pred_check
          %p264 = pneg %p263
        $region42: #{tpu_custom_call.1} parent=35 // pred_check_branch
          %266 = sbr.rel (%p264) target = $region44
        $region43: #{tpu_custom_call.1} parent=35 // pred_region
          %v267 = vld [vmem:[%s254] sm:$0xff]
          %v268 = vxor.u32 %v267, 2147483648
          %v269 = vmul.f32 %v268, 1.442695
          %v270 = vpow.pop %v269
          %v271 = vadd.f32 %v270, 1.0
          %v272 = vrcp.pop %v271
          %v273 = vmul.f32 1.0, %v272
          %v274 = vsub.f32 1.0, %v273
          %v275 = vsub.f32 0.0, %v267
          %v276 = vmax.f32 %v275, 0.0
          %v277 = vand.u32 2147483647, %v267
          %v278 = vsub.f32 0.0, %v277
          %v279 = vmul.f32 %v278, 1.442695
          %v280 = vpow.pop %v279
          %v281 = vadd.f32 %v280, 1.0
          %v282 = vlog2.pop %v281
          %v283 = vmul.f32 %v282, 0.6931472
          %v284 = vmul.f32 -0.5, %v280
          %v285 = vadd.f32 %v284, 1.0
          %v286 = vmul.f32 %v285, %v280
          %v287 = vand.u32 2147483647, %v280
          %vm288 = vcmp.lt.f32.partialorder %v287, 0.0004427343
          %v289 = vsel %vm288, %v286, %v283
          %v290 = vadd.f32 %v276, %v289
          %v291 = vadd.f32 %v267, %v290
          %v292 = vmul.f32 %v274, %v274
          %v293 = vmul.f32 %v292, 0.25
          %v294 = vmul.f32 %v293, %v290
          %v295 = vmul.f32 %v273, %v273
          %v296 = vmul.f32 %v295, 0.75
          %v297 = vmul.f32 %v296, %v291
          %v298 = vsub.f32 %v294, %v297
          %299 = vst [vmem:[#allocation2] sm:$0xff] %v298
        $region44: #{tpu_custom_call.1} parent=35 // pred_fallthru
          _
        %v300 = vld [vmem:[#allocation2] sm:$0xff]
        %v301 = vld [vmem:[#allocation3] sm:$0xff]
        %v302 = vld [vmem:[#allocation3 + $0x8] sm:$0xff]
        %v303 = vld [vmem:[#allocation3 + $0x10] sm:$0xff]
        %v304 = vld [vmem:[#allocation3 + $0x18] sm:$0xff]
        %v305 = vld [vmem:[#allocation3 + $0x20] sm:$0xff]
        %v306 = vld [vmem:[#allocation3 + $0x28] sm:$0xff]
        %v307 = vld [vmem:[#allocation3 + $0x30] sm:$0xff]
        %v308 = vld [vmem:[#allocation3 + $0x38] sm:$0xff]
        %v309 = vld [vmem:[#allocation3 + $0x40] sm:$0xff]
        %v310 = vld [vmem:[#allocation3 + $0x48] sm:$0xff]
        %v311 = vld [vmem:[#allocation3 + $0x50] sm:$0xff]
        %v312 = vld [vmem:[#allocation3 + $0x58] sm:$0xff]
        %v313 = vld [vmem:[#allocation3 + $0x60] sm:$0xff]
        %v314 = vld [vmem:[#allocation3 + $0x68] sm:$0xff]
        %v315 = vld [vmem:[#allocation3 + $0x70] sm:$0xff]
        %v316 = vld [vmem:[#allocation3 + $0x78] sm:$0xff]
        %v317 = vld [vmem:[%s258] sm:$0xff]
        %v318 = vld [vmem:[%s262] sm:$0xff]
        %320 = vset.pattern.permute.xlu0 0
        %321 = vperm.xlu0 %320, %v317
        %v322 = vpop.permute.xlu0 %321
        %v324 = vlaneseq
        %v325 = vshrl.u32 %v324, 7
        %v326 = vsub.s32 0, %v325
        %v327 = vrot.slane %v318, %v326
        %v328 = vsub.f32 %v322, %v327
        %v329 = vand.u32 2147483647, %v328
        %330 = vset.pattern.permute.xlu0 1
        %331 = vperm.xlu0 %330, %v317
        %v332 = vpop.permute.xlu0 %331
        %v334 = vlaneseq
        %v335 = vshrl.u32 %v334, 7
        %v336 = vsub.s32 1, %v335
        %v337 = vrot.slane %v318, %v336
        %v338 = vsub.f32 %v332, %v337
        %v339 = vand.u32 2147483647, %v338
        %v340 = vadd.f32 %v329, %v339
        %341 = vset.pattern.permute.xlu0 2
        %342 = vperm.xlu0 %341, %v317
        %v343 = vpop.permute.xlu0 %342
        %v345 = vlaneseq
        %v346 = vshrl.u32 %v345, 7
        %v347 = vsub.s32 2, %v346
        %v348 = vrot.slane %v318, %v347
        %v349 = vsub.f32 %v343, %v348
        %v350 = vand.u32 2147483647, %v349
        %v351 = vadd.f32 %v340, %v350
        %352 = vset.pattern.permute.xlu0 3
        %353 = vperm.xlu0 %352, %v317
        %v354 = vpop.permute.xlu0 %353
        %v356 = vlaneseq
        %v357 = vshrl.u32 %v356, 7
        %v358 = vsub.s32 3, %v357
        %v359 = vrot.slane %v318, %v358
        %v360 = vsub.f32 %v354, %v359
        %v361 = vand.u32 2147483647, %v360
        %v362 = vadd.f32 %v351, %v361
        %363 = vrot.lane.b32.xlu0 %v317, 127
        %v364 = vpop.permute.xlu0 %363
        %v366 = vmul.f32 %v317, %v364
        %v368 = vrot.slane %v318, 1
        %v370 = vmul.f32 %v318, %v368
        %371 = vset.pattern.permute.xlu0 6
        %372 = vperm.xlu0 %371, %v317
        %v373 = vpop.permute.xlu0 %372
        %v375 = vlaneseq
        %v376 = vshrl.u32 %v375, 7
        %v377 = vsub.s32 6, %v376
        %v378 = vrot.slane %v318, %v377
        %v379 = vmin.f32 %v373, %v378
        %380 = vset.pattern.permute.xlu0 4
        %381 = vperm.xlu0 %380, %v317
        %v382 = vpop.permute.xlu0 %381
        %v384 = vlaneseq
        %v385 = vshrl.u32 %v384, 7
        %v386 = vsub.s32 4, %v385
        %v387 = vrot.slane %v318, %v386
        %v388 = vmax.f32 %v382, %v387
        %v389 = vsub.f32 %v379, %v388
        %v390 = vmax.f32 %v389, 0.0
        %391 = vset.pattern.permute.xlu0 7
        %392 = vperm.xlu0 %391, %v317
        %v393 = vpop.permute.xlu0 %392
        %v395 = vlaneseq
        %v396 = vshrl.u32 %v395, 7
        %v397 = vsub.s32 7, %v396
        %v398 = vrot.slane %v318, %v397
        %v399 = vmin.f32 %v393, %v398
        %400 = vset.pattern.permute.xlu0 5
        %401 = vperm.xlu0 %400, %v317
        %v402 = vpop.permute.xlu0 %401
        %v404 = vlaneseq
        %v405 = vshrl.u32 %v404, 7
        %v406 = vsub.s32 5, %v405
        %v407 = vrot.slane %v318, %v406
        %v408 = vmax.f32 %v402, %v407
        %v409 = vsub.f32 %v399, %v408
        %v410 = vmax.f32 %v409, 0.0
        %v411 = vmul.f32 %v390, %v410
        %413 = vset.pattern.permute.xlu0 2
        %414 = vperm.xlu0 %413, %v366
        %v415 = vpop.permute.xlu0 %414
        %v417 = vlaneseq
        %v418 = vshrl.u32 %v417, 7
        %v419 = vsub.s32 2, %v418
        %v420 = vrot.slane %v370, %v419
        %v421 = vadd.f32 %v415, %v420
        %v422 = vsub.f32 %v421, %v411
        %v423 = vrcp.pop %v422
        %v424 = vmul.f32 %v411, %v423
        %v425 = vmax.f32 %v373, %v378
        %v426 = vmin.f32 %v382, %v387
        %v427 = vsub.f32 %v425, %v426
        %v428 = vmax.f32 %v393, %v398
        %v429 = vmin.f32 %v402, %v407
        %v430 = vsub.f32 %v428, %v429
        %v431 = vmul.f32 %v427, %v430
        %v432 = vrcp.pop %v431
        %v433 = vsub.f32 %v431, %v422
        %v434 = vmul.f32 %v433, %v432
        %v435 = vsub.f32 %v424, %v434
        %436 = vmatprep.subr.mxu0 0.0
        %437 = vmatpush1.msra.mxu0 %v301
        %438 = vmatprep.subr.mxu0 0.0
        %439 = vmatpush1.msra.mxu0 %v302
        %440 = vmatprep.subr.mxu0 0.0
        %441 = vmatpush1.msra.mxu0 %v303
        %442 = vmatprep.subr.mxu0 0.0
        %443 = vmatpush1.msra.mxu0 %v304
        %444 = vmatprep.subr.mxu0 0.0
        %445 = vmatpush1.msra.mxu0 %v305
        %446 = vmatprep.subr.mxu0 0.0
        %447 = vmatpush1.msra.mxu0 %v306
        %448 = vmatprep.subr.mxu0 0.0
        %449 = vmatpush1.msra.mxu0 %v307
        %450 = vmatprep.subr.mxu0 0.0
        %451 = vmatpush1.msra.mxu0 %v308
        %452 = vmatprep.subr.mxu0 0.0
        %453 = vmatpush1.msra.mxu0 %v309
        %454 = vmatprep.subr.mxu0 0.0
        %455 = vmatpush1.msra.mxu0 %v310
        %456 = vmatprep.subr.mxu0 0.0
        %457 = vmatpush1.msra.mxu0 %v311
        %458 = vmatprep.subr.mxu0 0.0
        %459 = vmatpush1.msra.mxu0 %v312
        %460 = vmatprep.subr.mxu0 0.0
        %461 = vmatpush1.msra.mxu0 %v313
        %462 = vmatprep.subr.mxu0 0.0
        %463 = vmatpush1.msra.mxu0 %v314
        %464 = vmatprep.subr.mxu0 0.0
        %465 = vmatpush1.msra.mxu0 %v315
        %466 = vmatprep.subr.mxu0 0.0
        %467 = vmatpush1.msra.mxu0 %v316
        %468 = vmatprep.subr.mxu0 0.0
        %469 = vmatpush1.msra.mxu0 0.0
        %470 = vmatprep.subr.mxu0 0.0
        %471 = vmatpush1.msra.mxu0 0.0
        %472 = vmatprep.subr.mxu0 0.0
        %473 = vmatpush1.msra.mxu0 0.0
        %474 = vmatprep.subr.mxu0 0.0
        %475 = vmatpush1.msra.mxu0 0.0
        %476 = vmatprep.subr.mxu0 0.0
        %477 = vmatpush1.msra.mxu0 0.0
        %478 = vmatprep.subr.mxu0 0.0
        %479 = vmatpush1.msra.mxu0 0.0
        %480 = vmatprep.subr.mxu0 0.0
        %481 = vmatpush1.msra.mxu0 0.0
        %482 = vmatprep.subr.mxu0 0.0
        %483 = vmatpush1.msra.mxu0 0.0
        %484 = vmatprep.subr.mxu0 0.0
        %485 = vmatpush1.msra.mxu0 0.0
        %486 = vmatprep.subr.mxu0 0.0
        %487 = vmatpush1.msra.mxu0 0.0
        %488 = vmatprep.subr.mxu0 0.0
        %489 = vmatpush1.msra.mxu0 0.0
        %490 = vmatprep.subr.mxu0 0.0
        %491 = vmatpush1.msra.mxu0 0.0
        %492 = vmatprep.subr.mxu0 0.0
        %493 = vmatpush1.msra.mxu0 0.0
        %494 = vmatprep.subr.mxu0 0.0
        %495 = vmatpush1.msra.mxu0 0.0
        %496 = vmatprep.subr.mxu0 0.0
        %497 = vmatpush1.msra.mxu0 0.0
        %498 = vmatprep.subr.mxu0 0.0
        %499 = vmatpush1.msra.mxu0 0.0
        %500 = vmatprep.mubr.f32.mxu0 0.0
        %501 = vmatmul.mubr.f32.gmra.mrb[0].mxu0 %v300
        %v502 = vpop.f32.mrb[0].mxu0
        %v503 = vadd.f32 %v362, %v502
        %v504 = vpop.f32.mrb[0].mxu0
        %505 = vdwg.mxu0
        %v506 = vsub.f32 %v503, %v435
        %507 = vst [vmem:[%s250] sm:$0xff] %v506
        %s508 = sand.u32 %s145, 1
        %s509 = scalar_lea.sflag [#allocation5], %s508
        %s510 = sand.u32 %s145, 1
        %s511 = smul.addr %s510, 8
        %s512 = scalar_lea.vmem [#allocation6], %s511
        // Predicated region
        $region45: #{tpu_custom_call.1} parent=35 // pred_check
          %p513 = pneg %p155
        $region46: #{tpu_custom_call.1} parent=35 // pred_check_branch
          %515 = sbr.rel (%p513) target = $region48
        $region47: #{tpu_custom_call.1} parent=35 // pred_region
          %s517 = ssub.s32 128, 128
          %518 = vsyncadd %s509, %s517
          %s519 = sadd.s32 %s24, %s23
          %s520 = smul.addr %s519, 128
          %s521 = scalar_lea.hbm %s4, %s520
          %s523 = sshll.u32 %s512, 4
          %s524 = int_to_ptr.vmem [resolvable:$true] %s523
          %526 = dma.vmem_to_hbm [thread:$0]  %s524, 128, %s521, %s509
        $region48: #{tpu_custom_call.1} parent=35 // pred_fallthru
          _
      $region36: #{tpu_custom_call.1} parent=5 // pred_fallthru
        _
      %p527 = scmp.le.s32.totalorder 2, %s14
      // Predicated region
      $region49: #{tpu_custom_call.1} parent=5 // pred_check
        %p528 = pneg %p527
      $region50: #{tpu_custom_call.1} parent=5 // pred_check_branch
        %530 = sbr.rel (%p528) target = $region52
      $region51: #{tpu_custom_call.1} parent=5 // pred_region
        %s531 = ssub.s32 %s14, 2
        // Predicated region
        $region53: #{tpu_custom_call.1} parent=51 // pred_check
          %p532 = pneg %p161
        $region54: #{tpu_custom_call.1} parent=51 // pred_check_branch
          %534 = sbr.rel (%p532) target = $region56
        $region55: #{tpu_custom_call.1} parent=51 // pred_region
          %s535 = sand.u32 %s146, 1
          %s536 = scalar_lea.sflag [#allocation5], %s535
          %s537 = sand.u32 %s146, 1
          %s538 = smul.addr %s537, 8
          %s539 = scalar_lea.vmem [#allocation6], %s538
          %540 = dma.done %s536, 128
        $region56: #{tpu_custom_call.1} parent=51 // pred_fallthru
          _
      $region52: #{tpu_custom_call.1} parent=5 // pred_fallthru
        _
    $region6: #{tpu_custom_call.1} parent=1 // loop_footer
      %s18 = sadd.s32 1, %s14
    $region7: #{tpu_custom_call.1} parent=1 // loop_footer_branch
      %13 = sbr.rel target = $region3
    $region8: #{tpu_custom_call.1} parent=1 // loop_exit
      _
    %541 = vsyncpa [#allocation4], 1
    %s542 = scalar_lea.sflag [#allocation4], 1
    %543 = vsyncpa %s542, 1
    %544 = vsyncpa [#allocation5], 1
    %s545 = scalar_lea.sflag [#allocation5], 1
    %546 = vsyncpa %s545, 1

</llo_original>
